<compile_context>
chip_gen: v7x
topology: tpu7x:2x2x1
jax: 0.10.0
libtpu: 0.0.40
codegen_flags: <defaults>
</compile_context>

<pallas_src>
import jax
import jax.numpy as jnp
from jax.experimental import pallas as pl
from jax.experimental.pallas import tpu as pltpu


def _round_up(n, m):
    return ((n + m - 1) // m) * m


def mlp_kernel(x_ref, w1_ref, b1_ref, w2_ref, b2_ref, o_ref):
    x = x_ref[...]                         # (in, tb)      batch on lanes
    w1 = w1_ref[...]                       # (hidden, in)  PyTorch layout
    in_size = w1.shape[1]                  # static (3)

    # fc1 as an unrolled VPU FMA chain of outer products: K=3 would use only
    # 3/128 of the MXU contraction dim, so skip the MXU entirely here.
    h = b1_ref[...] + w1[:, 0:1] * x[0:1, :]             # (hidden, tb)
    for k in range(1, in_size):                          # static, unrolled
        h = h + w1[:, k:k + 1] * x[k:k + 1, :]
    h = jnp.maximum(h, 0.0)                              # ReLU

    # fc2 on the MXU: (out, hidden) @ (hidden, tb), f32 accumulation.
    o = jnp.dot(w2_ref[...], h, preferred_element_type=jnp.float32) + b2_ref[...]
    o_ref[...] = o.astype(o_ref.dtype)                   # (out, tb) lane-dense store


def classical_nn_forward(x, w1, b1, w2, b2, *, block_batch=2048):
    """x: (B, in) f32.  Weights in PyTorch nn.Linear layout:
    w1 (hidden, in), b1 (hidden,), w2 (out, hidden), b2 (out,).
    Returns (B, out) f32 = fc2(relu(fc1(x)))."""
    B, in_size = x.shape
    hidden = w1.shape[0]
    out_size = w2.shape[0]

    # Batch tiling (lane axis):
    #  * B <= block_batch: single tile tb = B (a block last-dim equal to the full
    #    array dim is always legal) -> grid=(1,), no padding, no output slice,
    #    and only one ~0.35 us grid-step overhead.
    #  * larger B: 128-aligned tiles, padded batch, software-pipelined grid.
    #    VMEM per step (double-buffered x + out, sublanes padded to 8):
    #    2 * 2 * 8 * tb * 4 B  ~= 260 KiB at tb=2048 -> far under every
    #    generation's scoped VMEM limit (v7x's 64 MiB included).
    if B <= block_batch:
        tb = B
    else:
        tb = max(128, (block_batch // 128) * 128)
    Bp = _round_up(B, tb)

    x_t = x.T                                            # (in, B): layout plumbing only
    if Bp != B:
        x_t = jnp.pad(x_t, ((0, 0), (0, Bp - B)))

    b1c = b1.reshape(hidden, 1)
    b2c = b2.reshape(out_size, 1)

    grid = (Bp // tb,)

    def resident(a):
        # Same block index every step -> operand stays VMEM-resident across the grid.
        return pl.BlockSpec(a.shape, lambda i: (0,) * a.ndim)

    out_t = pl.pallas_call(
        mlp_kernel,
        out_shape=jax.ShapeDtypeStruct((out_size, Bp), jnp.float32),
        grid=grid,
        in_specs=[
            pl.BlockSpec((in_size, tb), lambda i: (0, i)),   # x^T tiled over batch lanes
            resident(w1),
            resident(b1c),
            resident(w2),
            resident(b2c),
        ],
        out_specs=pl.BlockSpec((out_size, tb), lambda i: (0, i)),
        compiler_params=pltpu.CompilerParams(
            # Batch tiles are independent -> megacore sharding on v7x when the
            # grid has >=2 balanced steps; no-op on v5e/v6e and at grid=(1,).
            dimension_semantics=("parallel",),
        ),
        cost_estimate=pl.CostEstimate(
            flops=2 * B * (in_size * hidden + hidden * out_size),
            transcendentals=0,
            bytes_accessed=4 * (B * (in_size + out_size)
                                + hidden * (in_size + 1)
                                + out_size * (hidden + 1)),
        ),
    )(x_t, w1, b1c, w2, b2c)

    out = out_t.T                                        # (Bp, out)
    if Bp != B:
        out = out[:B]
    return out


def init_params(key, input_size=3, hidden_size=32, output_size=2):
    # nn.Linear default init U(-1/sqrt(fan_in), 1/sqrt(fan_in)), PyTorch layouts.
    k1, k2, k3, k4 = jax.random.split(key, 4)
    lim1 = 1.0 / jnp.sqrt(input_size)
    lim2 = 1.0 / jnp.sqrt(hidden_size)
    w1 = jax.random.uniform(k1, (hidden_size, input_size), jnp.float32, -lim1, lim1)
    b1 = jax.random.uniform(k2, (hidden_size,), jnp.float32, -lim1, lim1)
    w2 = jax.random.uniform(k3, (output_size, hidden_size), jnp.float32, -lim2, lim2)
    b2 = jax.random.uniform(k4, (output_size,), jnp.float32, -lim2, lim2)
    return w1, b1, w2, b2


if __name__ == "__main__":
    key = jax.random.PRNGKey(0)
    kx, kp = jax.random.split(key)

    batch, input_size, hidden_size, output_size = 300, 3, 32, 2
    x = jax.random.normal(kx, (batch, input_size), jnp.float32)
    w1, b1, w2, b2 = init_params(kp, input_size, hidden_size, output_size)

    # Reference: same math as the PyTorch module.
    ref = jnp.maximum(x @ w1.T + b1[None, :], 0.0) @ w2.T + b2[None, :]

    # Single-tile path: tb=B=300, grid=(1,), no padding / no output slice.
    out = classical_nn_forward(x, w1, b1, w2, b2)
    out = jax.block_until_ready(out)
    assert out.shape == (batch, output_size)
    assert jnp.allclose(out, ref, atol=1e-5, rtol=1e-5)

    # Tiled path: tb=128 -> Bp=384, grid=(3,), exercises padding + pipelining.
    out2 = classical_nn_forward(x, w1, b1, w2, b2, block_batch=128)
    out2 = jax.block_until_ready(out2)
    assert jnp.allclose(out2, ref, atol=1e-5, rtol=1e-5)

    print("KERNEL_OK")
</pallas_src>

<mosaic_0001>
module attributes {stable_mosaic.version = 11 : i64} {
  func.func @mlp_kernel(%arg0: i32, %arg1: memref<3x300xf32, #tpu.memory_space<vmem>>, %arg2: memref<32x3xf32, #tpu.memory_space<vmem>>, %arg3: memref<32x1xf32, #tpu.memory_space<vmem>>, %arg4: memref<2x32xf32, #tpu.memory_space<vmem>>, %arg5: memref<2x1xf32, #tpu.memory_space<vmem>>, %arg6: memref<2x300xf32, #tpu.memory_space<vmem>>) attributes {dimension_semantics = [#tpu.dimension_semantics<parallel>], iteration_bounds = array<i64: 1>, scalar_prefetch = 0 : i64, scratch_operands = 0 : i64, tpu.core_type = #tpu.core_type<tc>, window_params = [{transform_indices = @transform_0, window_bounds = array<i64: 3, 300>}, {pipeline_mode = #tpu.pipeline_mode<synchronous>, transform_indices = @transform_1, window_bounds = array<i64: 32, 3>}, {pipeline_mode = #tpu.pipeline_mode<synchronous>, transform_indices = @transform_2, window_bounds = array<i64: 32, 1>}, {pipeline_mode = #tpu.pipeline_mode<synchronous>, transform_indices = @transform_3, window_bounds = array<i64: 2, 32>}, {pipeline_mode = #tpu.pipeline_mode<synchronous>, transform_indices = @transform_4, window_bounds = array<i64: 2, 1>}, {transform_indices = @transform_5, window_bounds = array<i64: 2, 300>}]} {
    %c0 = arith.constant 0 : index
    %c0_0 = arith.constant 0 : index
    %0 = vector.load %arg1[%c0, %c0_0] : memref<3x300xf32, #tpu.memory_space<vmem>>, vector<3x300xf32>
    %c0_1 = arith.constant 0 : index
    %c0_2 = arith.constant 0 : index
    %1 = vector.load %arg2[%c0_1, %c0_2] : memref<32x3xf32, #tpu.memory_space<vmem>>, vector<32x3xf32>
    %c0_3 = arith.constant 0 : index
    %c0_4 = arith.constant 0 : index
    %2 = vector.load %arg3[%c0_3, %c0_4] : memref<32x1xf32, #tpu.memory_space<vmem>>, vector<32x1xf32>
    %3 = vector.extract_strided_slice %1 {offsets = [0, 0], sizes = [32, 1], strides = [1, 1]} : vector<32x3xf32> to vector<32x1xf32>
    %4 = vector.extract_strided_slice %0 {offsets = [0, 0], sizes = [1, 300], strides = [1, 1]} : vector<3x300xf32> to vector<1x300xf32>
    %5 = vector.broadcast %3 : vector<32x1xf32> to vector<32x300xf32>
    %6 = vector.broadcast %4 : vector<1x300xf32> to vector<32x300xf32>
    %7 = arith.mulf %5, %6 : vector<32x300xf32>
    %8 = vector.broadcast %2 : vector<32x1xf32> to vector<32x300xf32>
    %9 = arith.addf %8, %7 : vector<32x300xf32>
    %10 = vector.extract_strided_slice %1 {offsets = [0, 1], sizes = [32, 1], strides = [1, 1]} : vector<32x3xf32> to vector<32x1xf32>
    %11 = vector.extract_strided_slice %0 {offsets = [1, 0], sizes = [1, 300], strides = [1, 1]} : vector<3x300xf32> to vector<1x300xf32>
    %12 = vector.broadcast %10 : vector<32x1xf32> to vector<32x300xf32>
    %13 = vector.broadcast %11 : vector<1x300xf32> to vector<32x300xf32>
    %14 = arith.mulf %12, %13 : vector<32x300xf32>
    %15 = arith.addf %9, %14 : vector<32x300xf32>
    %16 = vector.extract_strided_slice %1 {offsets = [0, 2], sizes = [32, 1], strides = [1, 1]} : vector<32x3xf32> to vector<32x1xf32>
    %17 = vector.extract_strided_slice %0 {offsets = [2, 0], sizes = [1, 300], strides = [1, 1]} : vector<3x300xf32> to vector<1x300xf32>
    %18 = vector.broadcast %16 : vector<32x1xf32> to vector<32x300xf32>
    %19 = vector.broadcast %17 : vector<1x300xf32> to vector<32x300xf32>
    %20 = arith.mulf %18, %19 : vector<32x300xf32>
    %21 = arith.addf %15, %20 : vector<32x300xf32>
    %cst = arith.constant 0.000000e+00 : f32
    %22 = vector.broadcast %cst : f32 to vector<32x300xf32>
    %23 = arith.maximumf %21, %22 : vector<32x300xf32>
    %c0_5 = arith.constant 0 : index
    %c0_6 = arith.constant 0 : index
    %24 = vector.load %arg4[%c0_5, %c0_6] : memref<2x32xf32, #tpu.memory_space<vmem>>, vector<2x32xf32>
    %cst_7 = arith.constant dense<0.000000e+00> : vector<2x300xf32>
    %25 = tpu.matmul %24, %23, %cst_7 {dimension_numbers = #tpu.dot_dimension_numbers<[1], [0], [0], [1], [0, 0, 1, 1], [], []>} : vector<2x32xf32>, vector<32x300xf32>, vector<2x300xf32> -> vector<2x300xf32>
    %c0_8 = arith.constant 0 : index
    %c0_9 = arith.constant 0 : index
    %26 = vector.load %arg5[%c0_8, %c0_9] : memref<2x1xf32, #tpu.memory_space<vmem>>, vector<2x1xf32>
    %27 = vector.broadcast %26 : vector<2x1xf32> to vector<2x300xf32>
    %28 = arith.addf %25, %27 : vector<2x300xf32>
    %c0_10 = arith.constant 0 : index
    %c0_11 = arith.constant 0 : index
    %29 = vector.load %arg6[%c0_10, %c0_11] : memref<2x300xf32, #tpu.memory_space<vmem>>, vector<2x300xf32>
    tpu.vector_store %arg6[%c0_10, %c0_11], %28 {strides = array<i32>} : memref<2x300xf32, #tpu.memory_space<vmem>>, vector<2x300xf32>,
    return
  }
  func.func @transform_0(%arg0: i32) -> (i32, i32) {
    %c0_i32 = arith.constant 0 : i32
    %c0_i32_0 = arith.constant 0 : i32
    return %c0_i32, %arg0 : i32, i32
  }
  func.func @transform_1(%arg0: i32) -> (i32, i32) {
    %c0_i32 = arith.constant 0 : i32
    %c0_i32_0 = arith.constant 0 : i32
    %c0_i32_1 = arith.constant 0 : i32
    return %c0_i32, %c0_i32_0 : i32, i32
  }
  func.func @transform_2(%arg0: i32) -> (i32, i32) {
    %c0_i32 = arith.constant 0 : i32
    %c0_i32_0 = arith.constant 0 : i32
    %c0_i32_1 = arith.constant 0 : i32
    return %c0_i32, %c0_i32_0 : i32, i32
  }
  func.func @transform_3(%arg0: i32) -> (i32, i32) {
    %c0_i32 = arith.constant 0 : i32
    %c0_i32_0 = arith.constant 0 : i32
    %c0_i32_1 = arith.constant 0 : i32
    return %c0_i32, %c0_i32_0 : i32, i32
  }
  func.func @transform_4(%arg0: i32) -> (i32, i32) {
    %c0_i32 = arith.constant 0 : i32
    %c0_i32_0 = arith.constant 0 : i32
    %c0_i32_1 = arith.constant 0 : i32
    return %c0_i32, %c0_i32_0 : i32, i32
  }
  func.func @transform_5(%arg0: i32) -> (i32, i32) {
    %c0_i32 = arith.constant 0 : i32
    %c0_i32_0 = arith.constant 0 : i32
    return %c0_i32, %arg0 : i32, i32
  }
}

</mosaic_0001>

<llo_original>
// kernel: tpu_custom_call.1
$region0: #{tpu_custom_call.1}
  #allocation0 [shape = 'u32[]', space=smem, size = 0x4, offset = 0x4, fixed_abs, tag = 'smem constant byte address 0x4 - core index']
  #allocation1 [shape = 'u32[144,128]{1,0:T(1,128)}', space=vmem, size = 0x12000, scoped, tag = 'internal scratch']
  %s0 = inlined_call_operand.vmem [shape: f32[3,300], index: 0, kind: input, shape index: {}]
  %s1 = inlined_call_operand.vmem [shape: f32[32,3], index: 1, kind: input, shape index: {}]
  %s2 = inlined_call_operand.vmem [shape: f32[32,1], index: 2, kind: input, shape index: {}]
  %s3 = inlined_call_operand.vmem [shape: f32[2,32], index: 3, kind: input, shape index: {}]
  %s4 = inlined_call_operand.vmem [shape: f32[2,1], index: 4, kind: input, shape index: {}]
  %s5 = inlined_call_operand.hbm [shape: f32[2,300], index: 5, kind: output, shape index: {}]
  %s6 = sld [smem:[#allocation0]]
  $region30: #{tpu_custom_call.1} parent=0
    _
  %s8 = ssub.s32 1, %s6
  %s9 = scalar_select 0, %s8, %s6
  $region1: #{tpu_custom_call.1} parent=0
    #allocation2 [shape = 'u8[3072]{0}', space=vmem, size = 0xc00, scoped, tag = 'output window, operand 0, single buffered']
    #allocation3 [shape = 's32[1]{0}', space=sflag, size = 0x4, scoped, tag = 'scoped memory for tpu_custom_call.1']
    %10 = vsyncpa [#allocation3], 0
    // Predicated region
    $region2: #{tpu_custom_call.1} parent=1 // pred_check
      _
    $region3: #{tpu_custom_call.1} parent=1 // pred_check_branch
      %12 = sbr.rel (0) target = $region5
    $region4: #{tpu_custom_call.1} parent=1 // pred_region
      _
    $region5: #{tpu_custom_call.1} parent=1 // pred_fallthru
      _
    // Predicated region
    $region6: #{tpu_custom_call.1} parent=1 // pred_check
      _
    $region7: #{tpu_custom_call.1} parent=1 // pred_check_branch
      %14 = sbr.rel (0) target = $region9
    $region8: #{tpu_custom_call.1} parent=1 // pred_region
      _
    $region9: #{tpu_custom_call.1} parent=1 // pred_fallthru
      _
    // Predicated region
    $region10: #{tpu_custom_call.1} parent=1 // pred_check
      _
    $region11: #{tpu_custom_call.1} parent=1 // pred_check_branch
      %16 = sbr.rel (0) target = $region13
    $region12: #{tpu_custom_call.1} parent=1 // pred_region
      _
    $region13: #{tpu_custom_call.1} parent=1 // pred_fallthru
      _
    // Predicated region
    $region14: #{tpu_custom_call.1} parent=1 // pred_check
      _
    $region15: #{tpu_custom_call.1} parent=1 // pred_check_branch
      %18 = sbr.rel (0) target = $region17
    $region16: #{tpu_custom_call.1} parent=1 // pred_region
      _
    $region17: #{tpu_custom_call.1} parent=1 // pred_fallthru
      _
    // Predicated region
    $region18: #{tpu_custom_call.1} parent=1 // pred_check
      _
    $region19: #{tpu_custom_call.1} parent=1 // pred_check_branch
      %20 = sbr.rel (0) target = $region21
    $region20: #{tpu_custom_call.1} parent=1 // pred_region
      _
    $region21: #{tpu_custom_call.1} parent=1 // pred_fallthru
      _
    %v21 = vld [vmem:[%s0] sm:$0x77]
    %v22 = vld [vmem:[%s0 + $0x8] sm:$0x7]
    %v23 = vld [vmem:[%s1] sm:$0xff]
    %v24 = vld [vmem:[%s1 + $0x8] sm:$0xff]
    %v25 = vld [vmem:[%s1 + $0x10] sm:$0xff]
    %v26 = vld [vmem:[%s1 + $0x18] sm:$0xff]
    %v27 = vld [vmem:[%s2] sm:$0xff]
    %v28 = vld [vmem:[%s2 + $0x8] sm:$0xff]
    %v29 = vld [vmem:[%s2 + $0x10] sm:$0xff]
    %v30 = vld [vmem:[%s2 + $0x18] sm:$0xff]
    %32 = vset.pattern.permute.xlu0 0
    %33 = vperm.xlu0 %32, %v23
    %v34 = vpop.permute.xlu0 %33
    %37 = vset.pattern.permute.xlu0 0
    %38 = vperm.xlu0 %37, %v24
    %v39 = vpop.permute.xlu0 %38
    %42 = vset.pattern.permute.xlu0 0
    %43 = vperm.xlu0 %42, %v25
    %v44 = vpop.permute.xlu0 %43
    %47 = vset.pattern.permute.xlu0 0
    %48 = vperm.xlu0 %47, %v26
    %v49 = vpop.permute.xlu0 %48
    %v53 = vlaneseq
    %v54 = vshrl.u32 %v53, 7
    %v55 = vsub.s32 0, %v54
    %v56 = vrot.slane %v21, %v55
    %v57 = vlaneseq
    %v58 = vshrl.u32 %v57, 7
    %v59 = vsub.s32 4, %v58
    %v60 = vrot.slane %v21, %v59
    %v61 = vlaneseq
    %v62 = vshrl.u32 %v61, 7
    %v63 = vsub.s32 0, %v62
    %v64 = vrot.slane %v22, %v63
    %v68 = vlaneseq
    %v69 = vshrl.u32 %v68, 7
    %v70 = vsub.s32 0, %v69
    %v71 = vrot.slane %v56, %v70
    %v72 = vlaneseq
    %v73 = vshrl.u32 %v72, 7
    %v74 = vsub.s32 0, %v73
    %v75 = vrot.slane %v60, %v74
    %v76 = vlaneseq
    %v77 = vshrl.u32 %v76, 7
    %v78 = vsub.s32 0, %v77
    %v79 = vrot.slane %v64, %v78
    %v80 = vmul.f32 %v34, %v71
    %v81 = vmul.f32 %v34, %v75
    %v82 = vmul.f32 %v34, %v79
    %v83 = vmul.f32 %v39, %v71
    %v84 = vmul.f32 %v39, %v75
    %v85 = vmul.f32 %v39, %v79
    %v86 = vmul.f32 %v44, %v71
    %v87 = vmul.f32 %v44, %v75
    %v88 = vmul.f32 %v44, %v79
    %v89 = vmul.f32 %v49, %v71
    %v90 = vmul.f32 %v49, %v75
    %v91 = vmul.f32 %v49, %v79
    %93 = vset.pattern.permute.xlu0 0
    %94 = vperm.xlu0 %93, %v27
    %v95 = vpop.permute.xlu0 %94
    %98 = vset.pattern.permute.xlu0 0
    %99 = vperm.xlu0 %98, %v28
    %v100 = vpop.permute.xlu0 %99
    %103 = vset.pattern.permute.xlu0 0
    %104 = vperm.xlu0 %103, %v29
    %v105 = vpop.permute.xlu0 %104
    %108 = vset.pattern.permute.xlu0 0
    %109 = vperm.xlu0 %108, %v30
    %v110 = vpop.permute.xlu0 %109
    %v112 = vadd.f32 %v95, %v80
    %v113 = vadd.f32 %v95, %v81
    %v114 = vadd.f32 %v95, %v82
    %v115 = vadd.f32 %v100, %v83
    %v116 = vadd.f32 %v100, %v84
    %v117 = vadd.f32 %v100, %v85
    %v118 = vadd.f32 %v105, %v86
    %v119 = vadd.f32 %v105, %v87
    %v120 = vadd.f32 %v105, %v88
    %v121 = vadd.f32 %v110, %v89
    %v122 = vadd.f32 %v110, %v90
    %v123 = vadd.f32 %v110, %v91
    %124 = vset.pattern.permute.xlu0 1
    %125 = vperm.xlu0 %124, %v23
    %v126 = vpop.permute.xlu0 %125
    %128 = vset.pattern.permute.xlu0 1
    %129 = vperm.xlu0 %128, %v24
    %v130 = vpop.permute.xlu0 %129
    %132 = vset.pattern.permute.xlu0 1
    %133 = vperm.xlu0 %132, %v25
    %v134 = vpop.permute.xlu0 %133
    %136 = vset.pattern.permute.xlu0 1
    %137 = vperm.xlu0 %136, %v26
    %v138 = vpop.permute.xlu0 %137
    %v140 = vlaneseq
    %v141 = vshrl.u32 %v140, 7
    %v142 = vsub.s32 1, %v141
    %v143 = vrot.slane %v21, %v142
    %v144 = vlaneseq
    %v145 = vshrl.u32 %v144, 7
    %v146 = vsub.s32 5, %v145
    %v147 = vrot.slane %v21, %v146
    %v148 = vlaneseq
    %v149 = vshrl.u32 %v148, 7
    %v150 = vsub.s32 1, %v149
    %v151 = vrot.slane %v22, %v150
    %v155 = vlaneseq
    %v156 = vshrl.u32 %v155, 7
    %v157 = vsub.s32 1, %v156
    %v158 = vrot.slane %v143, %v157
    %v159 = vlaneseq
    %v160 = vshrl.u32 %v159, 7
    %v161 = vsub.s32 1, %v160
    %v162 = vrot.slane %v147, %v161
    %v163 = vlaneseq
    %v164 = vshrl.u32 %v163, 7
    %v165 = vsub.s32 1, %v164
    %v166 = vrot.slane %v151, %v165
    %v167 = vmul.f32 %v126, %v158
    %v168 = vmul.f32 %v126, %v162
    %v169 = vmul.f32 %v126, %v166
    %v170 = vmul.f32 %v130, %v158
    %v171 = vmul.f32 %v130, %v162
    %v172 = vmul.f32 %v130, %v166
    %v173 = vmul.f32 %v134, %v158
    %v174 = vmul.f32 %v134, %v162
    %v175 = vmul.f32 %v134, %v166
    %v176 = vmul.f32 %v138, %v158
    %v177 = vmul.f32 %v138, %v162
    %v178 = vmul.f32 %v138, %v166
    %v179 = vadd.f32 %v112, %v167
    %v180 = vadd.f32 %v113, %v168
    %v181 = vadd.f32 %v114, %v169
    %v182 = vadd.f32 %v115, %v170
    %v183 = vadd.f32 %v116, %v171
    %v184 = vadd.f32 %v117, %v172
    %v185 = vadd.f32 %v118, %v173
    %v186 = vadd.f32 %v119, %v174
    %v187 = vadd.f32 %v120, %v175
    %v188 = vadd.f32 %v121, %v176
    %v189 = vadd.f32 %v122, %v177
    %v190 = vadd.f32 %v123, %v178
    %191 = vset.pattern.permute.xlu0 2
    %192 = vperm.xlu0 %191, %v23
    %v193 = vpop.permute.xlu0 %192
    %195 = vset.pattern.permute.xlu0 2
    %196 = vperm.xlu0 %195, %v24
    %v197 = vpop.permute.xlu0 %196
    %199 = vset.pattern.permute.xlu0 2
    %200 = vperm.xlu0 %199, %v25
    %v201 = vpop.permute.xlu0 %200
    %203 = vset.pattern.permute.xlu0 2
    %204 = vperm.xlu0 %203, %v26
    %v205 = vpop.permute.xlu0 %204
    %v207 = vlaneseq
    %v208 = vshrl.u32 %v207, 7
    %v209 = vsub.s32 2, %v208
    %v210 = vrot.slane %v21, %v209
    %v211 = vlaneseq
    %v212 = vshrl.u32 %v211, 7
    %v213 = vsub.s32 6, %v212
    %v214 = vrot.slane %v21, %v213
    %v215 = vlaneseq
    %v216 = vshrl.u32 %v215, 7
    %v217 = vsub.s32 2, %v216
    %v218 = vrot.slane %v22, %v217
    %v222 = vlaneseq
    %v223 = vshrl.u32 %v222, 7
    %v224 = vsub.s32 2, %v223
    %v225 = vrot.slane %v210, %v224
    %v226 = vlaneseq
    %v227 = vshrl.u32 %v226, 7
    %v228 = vsub.s32 2, %v227
    %v229 = vrot.slane %v214, %v228
    %v230 = vlaneseq
    %v231 = vshrl.u32 %v230, 7
    %v232 = vsub.s32 2, %v231
    %v233 = vrot.slane %v218, %v232
    %v234 = vmul.f32 %v193, %v225
    %v235 = vmul.f32 %v193, %v229
    %v236 = vmul.f32 %v193, %v233
    %v237 = vmul.f32 %v197, %v225
    %v238 = vmul.f32 %v197, %v229
    %v239 = vmul.f32 %v197, %v233
    %v240 = vmul.f32 %v201, %v225
    %v241 = vmul.f32 %v201, %v229
    %v242 = vmul.f32 %v201, %v233
    %v243 = vmul.f32 %v205, %v225
    %v244 = vmul.f32 %v205, %v229
    %v245 = vmul.f32 %v205, %v233
    %v246 = vadd.f32 %v179, %v234
    %v247 = vadd.f32 %v180, %v235
    %v248 = vadd.f32 %v181, %v236
    %v249 = vadd.f32 %v182, %v237
    %v250 = vadd.f32 %v183, %v238
    %v251 = vadd.f32 %v184, %v239
    %v252 = vadd.f32 %v185, %v240
    %v253 = vadd.f32 %v186, %v241
    %v254 = vadd.f32 %v187, %v242
    %v255 = vadd.f32 %v188, %v243
    %v256 = vadd.f32 %v189, %v244
    %v257 = vadd.f32 %v190, %v245
    %v258 = vmax.f32 %v246, 0.0
    %v259 = vmax.f32 %v247, 0.0
    %v260 = vmax.f32 %v248, 0.0
    %v261 = vmax.f32 %v249, 0.0
    %v262 = vmax.f32 %v250, 0.0
    %v263 = vmax.f32 %v251, 0.0
    %v264 = vmax.f32 %v252, 0.0
    %v265 = vmax.f32 %v253, 0.0
    %v266 = vmax.f32 %v254, 0.0
    %v267 = vmax.f32 %v255, 0.0
    %v268 = vmax.f32 %v256, 0.0
    %v269 = vmax.f32 %v257, 0.0
    %v270 = vld [vmem:[%s3] sm:$0x3]
    %v271 = vld [vmem:[%s4] sm:$0x3]
    %273 = vset.pattern.permute.xlu0 0
    %274 = vperm.xlu0 %273, %v271
    %v275 = vpop.permute.xlu0 %274
    %vm277 = vcmask 261120
    %v279 = vsel %vm277, %v270, 0
    %281 = vmatprep.subr.mxu0 %v259
    %282 = vmatpush1.msra.mxu0 %v258
    %283 = vmatprep.subr.mxu0 %v262
    %284 = vmatpush1.msra.mxu0 %v261
    %285 = vmatprep.subr.mxu0 %v265
    %286 = vmatpush1.msra.mxu0 %v264
    %287 = vmatprep.subr.mxu0 %v268
    %288 = vmatpush1.msra.mxu0 %v267
    %289 = vmatprep.subr.mxu0 0.0
    %290 = vmatpush1.msra.mxu0 0.0
    %291 = vmatprep.subr.mxu0 0.0
    %292 = vmatpush1.msra.mxu0 0.0
    %293 = vmatprep.subr.mxu0 0.0
    %294 = vmatpush1.msra.mxu0 0.0
    %295 = vmatprep.subr.mxu0 0.0
    %296 = vmatpush1.msra.mxu0 0.0
    %297 = vmatprep.subr.mxu0 0.0
    %298 = vmatpush1.msra.mxu0 0.0
    %299 = vmatprep.subr.mxu0 0.0
    %300 = vmatpush1.msra.mxu0 0.0
    %301 = vmatprep.subr.mxu0 0.0
    %302 = vmatpush1.msra.mxu0 0.0
    %303 = vmatprep.subr.mxu0 0.0
    %304 = vmatpush1.msra.mxu0 0.0
    %305 = vmatprep.subr.mxu0 0.0
    %306 = vmatpush1.msra.mxu0 0.0
    %307 = vmatprep.subr.mxu0 0.0
    %308 = vmatpush1.msra.mxu0 0.0
    %309 = vmatprep.subr.mxu0 0.0
    %310 = vmatpush1.msra.mxu0 0.0
    %311 = vmatprep.subr.mxu0 0.0
    %312 = vmatpush1.msra.mxu0 0.0
    %313 = vmatprep.subr.mxu0 0.0
    %314 = vmatpush1.msra.mxu0 0.0
    %315 = vmatprep.subr.mxu0 0.0
    %316 = vmatpush1.msra.mxu0 0.0
    %317 = vmatprep.subr.mxu0 0.0
    %318 = vmatpush1.msra.mxu0 0.0
    %319 = vmatprep.subr.mxu0 0.0
    %320 = vmatpush1.msra.mxu0 0.0
    %321 = vmatprep.subr.mxu0 0.0
    %322 = vmatpush1.msra.mxu0 0.0
    %323 = vmatprep.subr.mxu0 0.0
    %324 = vmatpush1.msra.mxu0 0.0
    %325 = vmatprep.subr.mxu0 0.0
    %326 = vmatpush1.msra.mxu0 0.0
    %327 = vmatprep.subr.mxu0 0.0
    %328 = vmatpush1.msra.mxu0 0.0
    %329 = vmatprep.subr.mxu0 0.0
    %330 = vmatpush1.msra.mxu0 0.0
    %331 = vmatprep.subr.mxu0 0.0
    %332 = vmatpush1.msra.mxu0 0.0
    %333 = vmatprep.subr.mxu0 0.0
    %334 = vmatpush1.msra.mxu0 0.0
    %335 = vmatprep.subr.mxu0 0.0
    %336 = vmatpush1.msra.mxu0 0.0
    %337 = vmatprep.subr.mxu0 0.0
    %338 = vmatpush1.msra.mxu0 0.0
    %339 = vmatprep.subr.mxu0 0.0
    %340 = vmatpush1.msra.mxu0 0.0
    %341 = vmatprep.subr.mxu0 0.0
    %342 = vmatpush1.msra.mxu0 0.0
    %343 = vmatprep.subr.mxu0 0.0
    %344 = vmatpush1.msra.mxu0 0.0
    %345 = vmatprep.mubr.f32.mxu0 0.0
    %346 = vmatmul.mubr.f32.gmra.mrb[0].mxu0 %v279
    %v347 = vpop.f32.mrb[0].mxu0
    %v348 = vadd.f32 %v275, %v347
    %v349 = vpop.f32.mrb[0].mxu0
    %v350 = vadd.f32 %v275, %v349
    %351 = vdwg.mxu0
    %352 = vmatprep.subr.mxu0 0.0
    %353 = vmatpush1.msra.mxu0 %v260
    %354 = vmatprep.subr.mxu0 0.0
    %355 = vmatpush1.msra.mxu0 %v263
    %356 = vmatprep.subr.mxu0 0.0
    %357 = vmatpush1.msra.mxu0 %v266
    %358 = vmatprep.subr.mxu0 0.0
    %359 = vmatpush1.msra.mxu0 %v269
    %360 = vmatprep.subr.mxu0 0.0
    %361 = vmatpush1.msra.mxu0 0.0
    %362 = vmatprep.subr.mxu0 0.0
    %363 = vmatpush1.msra.mxu0 0.0
    %364 = vmatprep.subr.mxu0 0.0
    %365 = vmatpush1.msra.mxu0 0.0
    %366 = vmatprep.subr.mxu0 0.0
    %367 = vmatpush1.msra.mxu0 0.0
    %368 = vmatprep.subr.mxu0 0.0
    %369 = vmatpush1.msra.mxu0 0.0
    %370 = vmatprep.subr.mxu0 0.0
    %371 = vmatpush1.msra.mxu0 0.0
    %372 = vmatprep.subr.mxu0 0.0
    %373 = vmatpush1.msra.mxu0 0.0
    %374 = vmatprep.subr.mxu0 0.0
    %375 = vmatpush1.msra.mxu0 0.0
    %376 = vmatprep.subr.mxu0 0.0
    %377 = vmatpush1.msra.mxu0 0.0
    %378 = vmatprep.subr.mxu0 0.0
    %379 = vmatpush1.msra.mxu0 0.0
    %380 = vmatprep.subr.mxu0 0.0
    %381 = vmatpush1.msra.mxu0 0.0
    %382 = vmatprep.subr.mxu0 0.0
    %383 = vmatpush1.msra.mxu0 0.0
    %384 = vmatprep.subr.mxu0 0.0
    %385 = vmatpush1.msra.mxu0 0.0
    %386 = vmatprep.subr.mxu0 0.0
    %387 = vmatpush1.msra.mxu0 0.0
    %388 = vmatprep.subr.mxu0 0.0
    %389 = vmatpush1.msra.mxu0 0.0
    %390 = vmatprep.subr.mxu0 0.0
    %391 = vmatpush1.msra.mxu0 0.0
    %392 = vmatprep.subr.mxu0 0.0
    %393 = vmatpush1.msra.mxu0 0.0
    %394 = vmatprep.subr.mxu0 0.0
    %395 = vmatpush1.msra.mxu0 0.0
    %396 = vmatprep.subr.mxu0 0.0
    %397 = vmatpush1.msra.mxu0 0.0
    %398 = vmatprep.subr.mxu0 0.0
    %399 = vmatpush1.msra.mxu0 0.0
    %400 = vmatprep.subr.mxu0 0.0
    %401 = vmatpush1.msra.mxu0 0.0
    %402 = vmatprep.subr.mxu0 0.0
    %403 = vmatpush1.msra.mxu0 0.0
    %404 = vmatprep.subr.mxu0 0.0
    %405 = vmatpush1.msra.mxu0 0.0
    %406 = vmatprep.subr.mxu0 0.0
    %407 = vmatpush1.msra.mxu0 0.0
    %408 = vmatprep.subr.mxu0 0.0
    %409 = vmatpush1.msra.mxu0 0.0
    %410 = vmatprep.subr.mxu0 0.0
    %411 = vmatpush1.msra.mxu0 0.0
    %412 = vmatprep.subr.mxu0 0.0
    %413 = vmatpush1.msra.mxu0 0.0
    %414 = vmatprep.subr.mxu0 0.0
    %415 = vmatpush1.msra.mxu0 0.0
    %416 = vmatprep.mubr.f32.mxu0 0.0
    %417 = vmatmul.mubr.f32.gmra.mrb[0].mxu0 %v279
    %v418 = vpop.f32.mrb[0].mxu0
    %v419 = vadd.f32 %v275, %v418
    %v420 = vpop.f32.mrb[0].mxu0
    %421 = vdwg.mxu0
    %v425 = vcombine.low %v348, %v350
    %v427 = vunpack.c.l.s4 1983009808
    %v428 = vunpack.c.0.s8 %v427
    %v429 = vlaneseq
    %v430 = vshrl.u32 %v429, 7
    %v431 = vsub.s32 %v428, %v430
    %v432 = vrot.slane %v425, %v431
    %v434 = vunpack.c.l.s4 1983009808
    %v435 = vunpack.c.0.s8 %v434
    %v436 = vlaneseq
    %v437 = vshrl.u32 %v436, 7
    %v438 = vsub.s32 %v435, %v437
    %v439 = vrot.slane %v419, %v438
    %v440 = vcombine.low %v432, %v439
    %vm442 = vcmask 1041408
    %vm443 = vcmask 1043458
    %vm444 = vmor %vm443, %vm442
    %vm445 = vcmask 357380
    %vm446 = vmor %vm445, %vm444
    %447 = vst.msk [vmem:[#allocation2] sm:$0x3f] %vm446, %v440
    // Predicated region
    $region22: #{tpu_custom_call.1} parent=1 // pred_check
      _
    $region23: #{tpu_custom_call.1} parent=1 // pred_check_branch
      %449 = sbr.rel (0) target = $region25
    $region24: #{tpu_custom_call.1} parent=1 // pred_region
      %s451 = ssub.s32 96, 96
      %452 = vsyncadd [#allocation3], %s451
      %s454 = sshll.u32 [#allocation2], 4
      %s455 = int_to_ptr.vmem [resolvable:$true] %s454
      %457 = dma.vmem_to_hbm [thread:$0]  %s455, 96, %s5, [#allocation3]
    $region25: #{tpu_custom_call.1} parent=1 // pred_fallthru
      _
    // Predicated region
    $region26: #{tpu_custom_call.1} parent=1 // pred_check
      _
    $region27: #{tpu_custom_call.1} parent=1 // pred_check_branch
      %459 = sbr.rel (0) target = $region29
    $region28: #{tpu_custom_call.1} parent=1 // pred_region
      %460 = dma.done [#allocation3], 96
    $region29: #{tpu_custom_call.1} parent=1 // pred_fallthru
      _
    %461 = vsyncpa [#allocation3], 1

</llo_original>
